<compile_context>
chip_gen: v7x
topology: tpu7x:2x2x1
jax: 0.10.0
libtpu: 0.0.40
codegen_flags: <defaults>
</compile_context>

<pallas_src>
import math

import jax
import jax.numpy as jnp
from jax import lax
from jax.experimental import pallas as pl
from jax.experimental.pallas import tpu as pltpu


_NEG_F32 = float(jnp.finfo(jnp.float32).min)


# --------------------------------------------------------------------------
# Hardware-aware defaults
# --------------------------------------------------------------------------
def _vmem_budget_bytes():
    """Returns (vmem_limit_bytes for CompilerParams, physical VMEM bytes)."""
    try:
        cap = int(pltpu.get_tpu_info().vmem_capacity_bytes)
    except Exception:
        cap = 64 * 1024 * 1024            # conservative (v7x-like) default
    limit = max(32 * 1024 * 1024, min(cap * 3 // 4, 100 * 1024 * 1024))
    return limit, cap


def _default_lane_target():
    # MXU tile target: 256 lanes on v6e/v7x, 128 on v5e and older.
    try:
        kind = jax.devices()[0].device_kind.lower()
        if any(t in kind for t in ("v2", "v3", "v4", "v5 lite", "v5e")):
            return 128
    except Exception:
        pass
    return 256


def _pick_heads_per_block(num_heads, head_dim, lane_target):
    """Largest head count whose packed width is layout-legal (multiple of 128
    lanes) and <= the MXU lane target; falls back to all heads (full-H block,
    always legal because it equals the full array dim)."""
    best = None
    for c in range(1, num_heads + 1):
        if num_heads % c:
            continue
        hd = c * head_dim
        if hd <= lane_target and hd % 128 == 0:
            best = c
    return best if best is not None else num_heads


def _pick_q_tile(seq_len, vmem_cap_bytes):
    # Bigger q tiles on chips with more VMEM (v5e/v6e: 128 MiB) -> fewer grid
    # steps; smaller cap on v7x (64 MiB).
    cap = 512 if vmem_cap_bytes >= 96 * 1024 * 1024 else 256
    if seq_len <= cap:
        return seq_len
    t = cap - (cap % 8)
    while t >= 8:
        if seq_len % t == 0:
            return t
        t -= 8
    return seq_len


def _pick_m_tile(m, cap=256):
    if m <= cap:
        return m
    t = cap - (cap % 8)
    while t >= 8:
        if m % t == 0:
            return t
        t -= 8
    return m


def _pick_k_tile(k, cap=256):
    if k <= cap:
        return k
    t = cap - (cap % 128)
    while t >= 128:
        if k % t == 0:
            return t
        t -= 128
    return k


# --------------------------------------------------------------------------
# Kernel 1: attention core (scores -> softmax -> context), head-blocked
# --------------------------------------------------------------------------
def _make_attn_kernel(*, has_mask, causal, tq, S, hpb, d, cdt):
    def body(mask_tile, q_ref, k_ref, v_ref, ctx_ref):
        qt = pl.program_id(2)
        q = q_ref[0]                           # (hpb, tq, d)  compute dtype
        k = k_ref[0]                           # (hpb, S,  d)
        v = v_ref[0]                           # (hpb, S,  d)

        # Scores on the MXU, f32 accumulate.  1/sqrt(d) already folded into Wq.
        s = lax.dot_general(q, k, (((2,), (2,)), ((0,), (0,))),
                            preferred_element_type=jnp.float32)  # (hpb, tq, S)

        if has_mask:
            # Module semantics: additive mask then clamp at finfo.min.
            s = jnp.maximum(s + mask_tile[None, :, :], _NEG_F32)
        elif causal:
            # Single select instead of add + max (VPU trim).
            row = qt * tq + lax.broadcasted_iota(jnp.int32, (tq, S), 0)
            col = lax.broadcasted_iota(jnp.int32, (tq, S), 1)
            s = jnp.where((col <= row)[None, :, :], s, _NEG_F32)

        # Softmax in f32, exact normalization.
        m = jnp.max(s, axis=-1, keepdims=True)
        e = jnp.exp(s - m)
        p = e / jnp.sum(e, axis=-1, keepdims=True)

        ctx = lax.dot_general(p.astype(cdt), v, (((2,), (1,)), ((0,), (0,))),
                              preferred_element_type=jnp.float32)  # (hpb,tq,d)

        # Pack heads into the lane dimension: (tq, hpb*d), lane-dense write.
        ctx = jnp.transpose(ctx, (1, 0, 2)).reshape(tq, hpb * d)
        ctx_ref[0] = ctx.astype(ctx_ref.dtype)

    if has_mask:
        def kernel(mask_ref, q_ref, k_ref, v_ref, ctx_ref):
            body(mask_ref[0, 0].astype(jnp.float32), q_ref, k_ref, v_ref,
                 ctx_ref)
    else:
        def kernel(q_ref, k_ref, v_ref, ctx_ref):
            body(None, q_ref, k_ref, v_ref, ctx_ref)
    return kernel


def _attention_core(q, k, v, attention_mask, *, causal, tq, hpb, vmem_limit):
    """q, k, v: (B, num_heads, S, d) in compute dtype (q pre-scaled).
    Returns head-packed context (B, S, H) in compute dtype."""
    B, nH, S, d = q.shape
    H = nH * d
    HB = nH // hpb
    NQ = S // tq
    cdt = q.dtype
    has_mask = attention_mask is not None

    kernel = _make_attn_kernel(has_mask=has_mask, causal=causal, tq=tq, S=S,
                               hpb=hpb, d=d, cdt=cdt)

    in_specs = []
    operands = []
    mask_bytes = 0
    if has_mask:
        if attention_mask.shape[0] == 1:
            mask_map = lambda b, hb, qt: (0, 0, qt, 0)
        else:
            mask_map = lambda b, hb, qt: (b, 0, qt, 0)
        in_specs.append(pl.BlockSpec((1, 1, tq, S), mask_map))
        operands.append(attention_mask)
        mask_bytes = int(attention_mask.size * attention_mask.dtype.itemsize
                         * HB)                      # re-fetched per head block

    in_specs += [
        # q tile follows the innermost axis; K/V block index is constant over
        # it, so K/V for a head block is DMA'd once per (batch, head block).
        pl.BlockSpec((1, hpb, tq, d), lambda b, hb, qt: (b, hb, qt, 0)),
        pl.BlockSpec((1, hpb, S, d), lambda b, hb, qt: (b, hb, 0, 0)),
        pl.BlockSpec((1, hpb, S, d), lambda b, hb, qt: (b, hb, 0, 0)),
    ]
    operands += [q, k, v]

    cb = jnp.dtype(cdt).itemsize
    cost = pl.CostEstimate(
        flops=int(4 * B * nH * S * S * d),
        transcendentals=int(B * nH * S * S),
        bytes_accessed=int(3 * B * nH * S * d * cb + B * S * H * cb
                           + mask_bytes))

    return pl.pallas_call(
        kernel,
        out_shape=jax.ShapeDtypeStruct((B, S, H), cdt),
        grid=(B, HB, NQ),
        in_specs=in_specs,
        out_specs=pl.BlockSpec((1, tq, hpb * d), lambda b, hb, qt: (b, qt, hb)),
        compiler_params=pltpu.CompilerParams(
            # No carried scratch state -> batch AND head-block axes can be
            # sharded across TensorCores (megacore works even for B == 1).
            dimension_semantics=("parallel", "parallel", "arbitrary"),
            vmem_limit_bytes=vmem_limit),
        cost_estimate=cost,
    )(*operands)


# --------------------------------------------------------------------------
# Kernel 2: out_proj as a canonical tiled matmul (f32 accumulator scratch)
# --------------------------------------------------------------------------
def _matmul_kernel(a_ref, b_ref, o_ref, acc_ref):
    @pl.when(pl.program_id(1) == 0)
    def _init():
        acc_ref[...] = jnp.zeros_like(acc_ref)

    acc_ref[...] += jnp.dot(a_ref[...], b_ref[...],
                            preferred_element_type=jnp.float32)

    @pl.when(pl.program_id(1) == pl.num_programs(1) - 1)
    def _store():
        o_ref[...] = acc_ref[...].astype(o_ref.dtype)


def _out_projection(ctx2d, wo_t, out_dtype, *, vmem_limit):
    M, K = ctx2d.shape
    N = wo_t.shape[1]
    tm = _pick_m_tile(M)
    tk = _pick_k_tile(K)
    cb = ctx2d.dtype.itemsize
    cost = pl.CostEstimate(
        flops=int(2 * M * K * N), transcendentals=0,
        bytes_accessed=int(M * K * cb + (M // tm) * K * N * cb
                           + M * N * jnp.dtype(out_dtype).itemsize))
    return pl.pallas_call(
        _matmul_kernel,
        out_shape=jax.ShapeDtypeStruct((M, N), out_dtype),
        grid=(M // tm, K // tk),
        in_specs=[pl.BlockSpec((tm, tk), lambda i, kk: (i, kk)),
                  pl.BlockSpec((tk, N), lambda i, kk: (kk, 0))],
        out_specs=pl.BlockSpec((tm, N), lambda i, kk: (i, 0)),
        scratch_shapes=[pltpu.VMEM((tm, N), jnp.float32)],
        compiler_params=pltpu.CompilerParams(
            dimension_semantics=("parallel", "arbitrary"),
            vmem_limit_bytes=vmem_limit),
        cost_estimate=cost,
    )(ctx2d, wo_t)


# --------------------------------------------------------------------------
# Public entry point
# --------------------------------------------------------------------------
def opt_attention_heavy_hitter(hidden_states, wq, wk, wv, wo, num_heads,
                               attention_mask=None, causal=True,
                               compute_dtype=None, q_tile=None,
                               heads_per_block=None):
    """Forward pass of OPTAttention_heavy_hitter (no KV cache, no dropout).

    hidden_states : (B, S, H)
    wq, wk, wv, wo: (H, H) PyTorch nn.Linear layout [out_features, in_features]
    attention_mask: optional (B, 1, S, S) or (1, 1, S, S) additive mask; if
                    given it must already encode causality (module semantics).
                    If None and causal=True, a causal mask is generated inside
                    the kernel (no mask DMA).
    compute_dtype : MXU-feed dtype (e.g. jnp.bfloat16); accumulation is f32.
    Returns       : (B, S, H) in hidden_states.dtype.
    """
    B, S, H = hidden_states.shape
    d = H // num_heads
    assert d * num_heads == H, "hidden_size must be divisible by num_heads"

    out_dtype = hidden_states.dtype
    cdt = jnp.dtype(out_dtype if compute_dtype is None else compute_dtype)

    vmem_limit, vmem_cap = _vmem_budget_bytes()
    hpb = heads_per_block or _pick_heads_per_block(num_heads, d,
                                                   _default_lane_target())
    assert num_heads % hpb == 0
    tq = q_tile or _pick_q_tile(S, vmem_cap)
    assert S % tq == 0

    # ---- Q/K/V projections hoisted to XLA (review fix for weight
    # re-streaming); 1/sqrt(d) folded into Wq on the host.
    x = hidden_states.astype(cdt)
    scale = 1.0 / math.sqrt(d)
    q = (x @ (wq * scale).T.astype(cdt)).reshape(B, S, num_heads, d)
    k = (x @ wk.T.astype(cdt)).reshape(B, S, num_heads, d)
    v = (x @ wv.T.astype(cdt)).reshape(B, S, num_heads, d)
    q = q.transpose(0, 2, 1, 3).astype(cdt)       # (B, nH, S, d)
    k = k.transpose(0, 2, 1, 3).astype(cdt)
    v = v.transpose(0, 2, 1, 3).astype(cdt)

    if attention_mask is not None:
        attention_mask = attention_mask.astype(jnp.float32)

    # ---- Pallas kernel 1: attention core -> head-packed context (B, S, H).
    ctx = _attention_core(q, k, v, attention_mask, causal=causal, tq=tq,
                          hpb=hpb, vmem_limit=vmem_limit)

    # ---- Pallas kernel 2: out_proj (ctx @ Wo^T) as a tiled matmul.
    out2d = _out_projection(ctx.reshape(B * S, H), wo.T.astype(cdt),
                            out_dtype, vmem_limit=vmem_limit)
    return out2d.reshape(B, S, H)


# --------------------------------------------------------------------------
# Pure-JAX reference mirroring the PyTorch module
# --------------------------------------------------------------------------
def _ref_forward(x, wq, wk, wv, wo, mask, num_heads):
    B, S, H = x.shape
    d = H // num_heads
    q = (x @ wq.T).reshape(B, S, num_heads, d).transpose(0, 2, 1, 3)
    k = (x @ wk.T).reshape(B, S, num_heads, d).transpose(0, 2, 1, 3)
    v = (x @ wv.T).reshape(B, S, num_heads, d).transpose(0, 2, 1, 3)
    w = jnp.einsum('bhqd,bhkd->bhqk', q, k) / math.sqrt(d)
    if mask is not None:
        w = jnp.maximum(w + mask, jnp.finfo(jnp.float32).min)
    w = jax.nn.softmax(w.astype(jnp.float32), axis=-1).astype(q.dtype)
    o = jnp.einsum('bhqk,bhkd->bhqd', w, v)
    o = o.transpose(0, 2, 1, 3).reshape(B, S, H)
    return o @ wo.T


def _causal_additive_mask(B, S):
    neg = jnp.finfo(jnp.float32).min
    m = jnp.where(jnp.tril(jnp.ones((S, S), dtype=bool)), 0.0, neg)
    return jnp.broadcast_to(m[None, None, :, :], (B, 1, S, S))


if __name__ == "__main__":
    # ---------------- small OPT-like config: B=2, S=16, H=32, 4 heads -------
    B, S, H, NUM_HEADS = 2, 16, 32, 4
    key = jax.random.PRNGKey(0)
    kx, kq, kk, kv, ko = jax.random.split(key, 5)

    hidden_states = jax.random.normal(kx, (B, S, H), jnp.float32)
    wq = jax.random.normal(kq, (H, H), jnp.float32) * 0.1
    wk = jax.random.normal(kk, (H, H), jnp.float32) * 0.1
    wv = jax.random.normal(kv, (H, H), jnp.float32) * 0.1
    wo = jax.random.normal(ko, (H, H), jnp.float32) * 0.1

    attention_mask = _causal_additive_mask(B, S)
    ref = _ref_forward(hidden_states, wq, wk, wv, wo, attention_mask,
                       NUM_HEADS)

    # 1) in-kernel causal mask, two q tiles (exercises the inner grid axis).
    out1 = opt_attention_heavy_hitter(hidden_states, wq, wk, wv, wo,
                                      NUM_HEADS, causal=True, q_tile=8)
    out1 = jax.block_until_ready(out1)
    assert out1.shape == (B, S, H)
    assert jnp.allclose(out1, ref, rtol=2e-3, atol=2e-4), \
        "causal path mismatch vs reference"

    # 2) explicit additive mask (module semantics).
    out2 = opt_attention_heavy_hitter(hidden_states, wq, wk, wv, wo,
                                      NUM_HEADS,
                                      attention_mask=attention_mask)
    out2 = jax.block_until_ready(out2)
    assert jnp.allclose(out2, ref, rtol=2e-3, atol=2e-4), \
        "masked path mismatch vs reference"

    # 3) bf16 MXU feed / f32 accumulate.
    out3 = opt_attention_heavy_hitter(hidden_states, wq, wk, wv, wo,
                                      NUM_HEADS, causal=True,
                                      compute_dtype=jnp.bfloat16)
    out3 = jax.block_until_ready(out3)
    assert jnp.allclose(out3.astype(jnp.float32), ref, rtol=5e-2, atol=1e-2), \
        "bf16 path mismatch vs reference"

    # 4) multi-head-block case (128-lane-aligned head packing, HB >= 2).
    B4, S4, H4, NH4 = 1, 16, 512, 8
    key4 = jax.random.PRNGKey(0)
    k4x, k4q, k4k, k4v, k4o = jax.random.split(key4, 5)
    w_scale = 1.0 / math.sqrt(H4)
    x4 = jax.random.normal(k4x, (B4, S4, H4), jnp.float32)
    wq4 = jax.random.normal(k4q, (H4, H4), jnp.float32) * w_scale
    wk4 = jax.random.normal(k4k, (H4, H4), jnp.float32) * w_scale
    wv4 = jax.random.normal(k4v, (H4, H4), jnp.float32) * w_scale
    wo4 = jax.random.normal(k4o, (H4, H4), jnp.float32) * w_scale
    mask4 = _causal_additive_mask(B4, S4)
    ref4 = _ref_forward(x4, wq4, wk4, wv4, wo4, mask4, NH4)
    out4 = opt_attention_heavy_hitter(x4, wq4, wk4, wv4, wo4, NH4,
                                      causal=True)
    out4 = jax.block_until_ready(out4)
    assert jnp.allclose(out4, ref4, rtol=2e-3, atol=2e-3), \
        "multi-head-block path mismatch vs reference"

    print("KERNEL_OK")
</pallas_src>

<mosaic_0001>
module attributes {stable_mosaic.version = 11 : i64} {
  func.func @kernel(%arg0: i32, %arg1: i32, %arg2: i32, %arg3: memref<1x4x8x8xf32, #tpu.memory_space<vmem>>, %arg4: memref<1x4x16x8xf32, #tpu.memory_space<vmem>>, %arg5: memref<1x4x16x8xf32, #tpu.memory_space<vmem>>, %arg6: memref<1x8x32xf32, #tpu.memory_space<vmem>>) attributes {dimension_semantics = [#tpu.dimension_semantics<parallel>, #tpu.dimension_semantics<parallel>, #tpu.dimension_semantics<arbitrary>], iteration_bounds = array<i64: 2, 1, 2>, scalar_prefetch = 0 : i64, scratch_operands = 0 : i64, tpu.core_type = #tpu.core_type<tc>, window_params = [{transform_indices = @transform_0, window_bounds = array<i64: 1, 4, 8, 8>}, {transform_indices = @transform_1, window_bounds = array<i64: 1, 4, 16, 8>}, {transform_indices = @transform_2, window_bounds = array<i64: 1, 4, 16, 8>}, {transform_indices = @transform_3, window_bounds = array<i64: 1, 8, 32>}]} {
    %c0 = arith.constant 0 : index
    %c0_0 = arith.constant 0 : index
    %c0_1 = arith.constant 0 : index
    %c0_2 = arith.constant 0 : index
    %0 = vector.load %arg3[%c0, %c0_0, %c0_1, %c0_2] : memref<1x4x8x8xf32, #tpu.memory_space<vmem>>, vector<1x4x8x8xf32>
    %1 = vector.shape_cast %0 : vector<1x4x8x8xf32> to vector<4x8x8xf32>
    %c0_3 = arith.constant 0 : index
    %c0_4 = arith.constant 0 : index
    %c0_5 = arith.constant 0 : index
    %c0_6 = arith.constant 0 : index
    %2 = vector.load %arg4[%c0_3, %c0_4, %c0_5, %c0_6] : memref<1x4x16x8xf32, #tpu.memory_space<vmem>>, vector<1x4x16x8xf32>
    %3 = vector.shape_cast %2 : vector<1x4x16x8xf32> to vector<4x16x8xf32>
    %c0_7 = arith.constant 0 : index
    %c0_8 = arith.constant 0 : index
    %c0_9 = arith.constant 0 : index
    %c0_10 = arith.constant 0 : index
    %4 = vector.load %arg5[%c0_7, %c0_8, %c0_9, %c0_10] : memref<1x4x16x8xf32, #tpu.memory_space<vmem>>, vector<1x4x16x8xf32>
    %5 = vector.shape_cast %4 : vector<1x4x16x8xf32> to vector<4x16x8xf32>
    %cst = arith.constant dense<0.000000e+00> : vector<4x8x16xf32>
    %6 = tpu.matmul %1, %3, %cst {dimension_numbers = #tpu.dot_dimension_numbers<[2], [2], [1], [1], [0, 0, 0, 1, 1, 1], [0], [0]>} : vector<4x8x8xf32>, vector<4x16x8xf32>, vector<4x8x16xf32> -> vector<4x8x16xf32>
    %c8_i32 = arith.constant 8 : i32
    %7 = arith.muli %arg2, %c8_i32 : i32
    %8 = tpu.iota {dimensions = array<i32: 0>} : vector<8x16xi32>
    %9 = vector.broadcast %7 : i32 to vector<8x16xi32>
    %10 = arith.addi %9, %8 : vector<8x16xi32>
    %11 = tpu.iota {dimensions = array<i32: 1>} : vector<8x16xi32>
    %12 = arith.cmpi sle, %11, %10 : vector<8x16xi32>
    %13 = vector.shape_cast %12 : vector<8x16xi1> to vector<1x8x16xi1>
    %cst_11 = arith.constant -3.40282347E+38 : f32
    %14 = vector.shape_cast %13 : vector<1x8x16xi1> to vector<1x8x16xi1>
    %15 = vector.broadcast %14 : vector<1x8x16xi1> to vector<4x8x16xi1>
    %16 = vector.broadcast %cst_11 : f32 to vector<4x8x16xf32>
    %17 = arith.select %15, %6, %16 : vector<4x8x16xi1>, vector<4x8x16xf32>
    %cst_12 = arith.constant dense<0xFF800000> : vector<4x8xf32>
    %18 = vector.multi_reduction <maximumf>, %17, %cst_12 [2] : vector<4x8x16xf32> to vector<4x8xf32>
    %19 = vector.shape_cast %18 : vector<4x8xf32> to vector<4x8x1xf32>
    %20 = vector.broadcast %19 : vector<4x8x1xf32> to vector<4x8x16xf32>
    %21 = arith.subf %17, %20 : vector<4x8x16xf32>
    %22 = math.exp %21 : vector<4x8x16xf32>
    %cst_13 = arith.constant dense<0.000000e+00> : vector<4x8xf32>
    %23 = vector.multi_reduction <add>, %22, %cst_13 [2] : vector<4x8x16xf32> to vector<4x8xf32>
    %24 = vector.shape_cast %23 : vector<4x8xf32> to vector<4x8x1xf32>
    %25 = vector.broadcast %24 : vector<4x8x1xf32> to vector<4x8x16xf32>
    %26 = arith.divf %22, %25 : vector<4x8x16xf32>
    %cst_14 = arith.constant dense<0.000000e+00> : vector<4x8x8xf32>
    %27 = tpu.matmul %26, %5, %cst_14 {dimension_numbers = #tpu.dot_dimension_numbers<[2], [1], [1], [2], [0, 0, 0, 1, 1, 2], [0], [0]>} : vector<4x8x16xf32>, vector<4x16x8xf32>, vector<4x8x8xf32> -> vector<4x8x8xf32>
    %28 = tpu.transpose %27, [1, 0, 2] : vector<4x8x8xf32> -> vector<8x4x8xf32>
    %29 = vector.shape_cast %28 : vector<8x4x8xf32> to vector<8x32xf32>
    %c0_15 = arith.constant 0 : index
    %c0_16 = arith.constant 0 : index
    %c0_17 = arith.constant 0 : index
    %30 = vector.load %arg6[%c0_15, %c0_16, %c0_17] : memref<1x8x32xf32, #tpu.memory_space<vmem>>, vector<1x8x32xf32>
    %31 = vector.shape_cast %30 : vector<1x8x32xf32> to vector<8x32xf32>
    %32 = vector.shape_cast %29 : vector<8x32xf32> to vector<1x8x32xf32>
    tpu.vector_store %arg6[%c0_15, %c0_16, %c0_17], %32 {strides = array<i32>} : memref<1x8x32xf32, #tpu.memory_space<vmem>>, vector<1x8x32xf32>,
    return
  }
  func.func @transform_0(%arg0: i32, %arg1: i32, %arg2: i32) -> (i32, i32, i32, i32) {
    %c0_i32 = arith.constant 0 : i32
    %c0_i32_0 = arith.constant 0 : i32
    return %arg0, %arg1, %arg2, %c0_i32 : i32, i32, i32, i32
  }
  func.func @transform_1(%arg0: i32, %arg1: i32, %arg2: i32) -> (i32, i32, i32, i32) {
    %c0_i32 = arith.constant 0 : i32
    %c0_i32_0 = arith.constant 0 : i32
    %c0_i32_1 = arith.constant 0 : i32
    return %arg0, %arg1, %c0_i32, %c0_i32_0 : i32, i32, i32, i32
  }
  func.func @transform_2(%arg0: i32, %arg1: i32, %arg2: i32) -> (i32, i32, i32, i32) {
    %c0_i32 = arith.constant 0 : i32
    %c0_i32_0 = arith.constant 0 : i32
    %c0_i32_1 = arith.constant 0 : i32
    return %arg0, %arg1, %c0_i32, %c0_i32_0 : i32, i32, i32, i32
  }
  func.func @transform_3(%arg0: i32, %arg1: i32, %arg2: i32) -> (i32, i32, i32) {
    %c0_i32 = arith.constant 0 : i32
    return %arg0, %arg2, %arg1 : i32, i32, i32
  }
}

</mosaic_0001>

<llo_original>
// kernel: tpu_custom_call.1
$region0: #{tpu_custom_call.1}
  #allocation0 [shape = 'u32[]', space=smem, size = 0x4, offset = 0x4, fixed_abs, tag = 'smem constant byte address 0x4 - core index']
  #allocation1 [shape = 'u32[144,128]{1,0:T(1,128)}', space=vmem, size = 0x12000, scoped, tag = 'internal scratch']
  %s0 = inlined_call_operand.vmem [shape: f32[2,4,16,8], index: 0, kind: input, shape index: {}]
  %s1 = inlined_call_operand.vmem [shape: f32[2,4,16,8], index: 1, kind: input, shape index: {}]
  %s2 = inlined_call_operand.vmem [shape: f32[2,4,16,8], index: 2, kind: input, shape index: {}]
  %s3 = inlined_call_operand.hbm [shape: f32[2,16,32], index: 3, kind: output, shape index: {}]
  %s4 = sld [smem:[#allocation0]]
  $region83: #{tpu_custom_call.1} parent=0
    _
  %s6 = ssub.s32 1, %s4
  %s7 = scalar_select 0, %s6, %s4
  $region1: #{tpu_custom_call.1} parent=0
    #allocation2 [shape = 'u8[32768]{0}', space=vmem, size = 0x8000, scoped, tag = 'input window, operand 0']
    #allocation3 [shape = 'u8[8192]{0}', space=vmem, size = 0x2000, scoped, tag = 'output window, operand 0']
    #allocation4 [shape = 's32[2]{0}', space=sflag, size = 0x8, scoped, tag = 'scoped memory for tpu_custom_call.1']
    %8 = vsyncpa [#allocation4], 0
    %s9 = scalar_lea.sflag [#allocation4], 1
    %10 = vsyncpa %s9, 0
    loop: start=0, step=1, limit=6
    $region2: #{tpu_custom_call.1} parent=1 // loop_pre_header
      _
    $region3: #{tpu_custom_call.1} parent=1 // loop_header
      %s12 = sphi 0, %s16
      %p13 = scmp.ge.s32.totalorder %s12, 6
      %s19 = sphi 0, %s38
      %s20 = sphi 0, %s34
      %s21 = sphi 0, %s30
      %s22 = sphi 0, %s19
      %s23 = sphi 0, %s20
      %s24 = sphi 0, %s21
      %s25 = sphi 0, %s22
      %s26 = sphi 0, %s23
      %s27 = sphi 0, %s24
      %s45 = sphi 0, %s47
      %s48 = sphi 0, %s45
      %s49 = sphi 0, %s48
      %s65 = sphi 0, %s49
      %s73 = sphi 0, %s75
      %s76 = sphi 0, %s73
      %s77 = sphi 0, %s76
      %s93 = sphi 0, %s77
      %s101 = sphi 0, %s103
      %s104 = sphi 0, %s101
      %s105 = sphi 0, %s104
      %s121 = sphi 0, %s105
      %s131 = sphi 0, %s133
      %s134 = sphi 0, %s131
      %s135 = sphi 0, %s134
      %s151 = sphi 0, %s135
    $region4: #{tpu_custom_call.1} parent=1 // loop_header_branch
      %15 = sbr.rel (%p13) target = $region8
    $region5: #{tpu_custom_call.1} parent=1 // loop_body
      %s17 = ssub.s32 %s12, 1
      %s18 = ssub.s32 %s12, 2
      %s28 = sadd.s32 1, %s21
      %p29 = scmp.ge.s32.totalorder %s28, 2
      %s30 = scalar_select %p29, 0, %s28
      %s31 = sadd.s32 1, %s20
      %s32 = scalar_select %p29, %s31, %s20
      %p33 = scmp.ge.s32.totalorder %s32, 1
      %s34 = scalar_select %p33, 0, %s32
      %s35 = sadd.s32 1, %s19
      %s36 = scalar_select %p33, %s35, %s19
      %p37 = scmp.ge.s32.totalorder %s36, 2
      %s38 = scalar_select %p37, 0, %s36
      %s39 = ssub.s32 %s19, %s38
      %s40 = ssub.s32 %s20, %s34
      %s41 = sor.u32 %s39, %s40
      %s42 = ssub.s32 %s21, %s30
      %s43 = sor.u32 %s41, %s42
      %p44 = scmp.eq.s32.totalorder %s43, 0
      %s46 = sadd.s32 %s45, 1
      %s47 = scalar_select %p44, %s45, %s46
      %p50 = pneg %p44
      %p51 = scmp.eq.s32.totalorder %s12, 3
      %p52 = por %p50, %p51
      %p53 = scmp.ne.s32.totalorder %s45, %s48
      %p54 = scmp.eq.s32.totalorder %s12, 0
      %p55 = por %p53, %p54
      %p56 = scmp.ne.s32.totalorder %s45, %s48
      %p57 = scmp.eq.s32.totalorder %s17, 3
      %p58 = por %p56, %p57
      %p59 = scmp.ne.s32.totalorder %s48, %s49
      %p60 = scmp.eq.s32.totalorder %s17, 0
      %p61 = por %p59, %p60
      %p62 = scmp.ne.s32.totalorder %s48, %s49
      %p63 = scmp.eq.s32.totalorder %s18, 3
      %p64 = por %p62, %p63
      %p66 = scmp.ne.s32.totalorder %s49, %s65
      %p67 = scmp.eq.s32.totalorder %s18, 0
      %p68 = por %p66, %p67
      %s69 = ssub.s32 %s19, %s38
      %s70 = ssub.s32 %s20, %s34
      %s71 = sor.u32 %s69, %s70
      %p72 = scmp.eq.s32.totalorder %s71, 0
      %s74 = sadd.s32 %s73, 1
      %s75 = scalar_select %p72, %s73, %s74
      %p78 = pneg %p72
      %p79 = scmp.eq.s32.totalorder %s12, 3
      %p80 = por %p78, %p79
      %p81 = scmp.ne.s32.totalorder %s73, %s76
      %p82 = scmp.eq.s32.totalorder %s12, 0
      %p83 = por %p81, %p82
      %p84 = scmp.ne.s32.totalorder %s73, %s76
      %p85 = scmp.eq.s32.totalorder %s17, 3
      %p86 = por %p84, %p85
      %p87 = scmp.ne.s32.totalorder %s76, %s77
      %p88 = scmp.eq.s32.totalorder %s17, 0
      %p89 = por %p87, %p88
      %p90 = scmp.ne.s32.totalorder %s76, %s77
      %p91 = scmp.eq.s32.totalorder %s18, 3
      %p92 = por %p90, %p91
      %p94 = scmp.ne.s32.totalorder %s77, %s93
      %p95 = scmp.eq.s32.totalorder %s18, 0
      %p96 = por %p94, %p95
      %s97 = ssub.s32 %s19, %s38
      %s98 = ssub.s32 %s20, %s34
      %s99 = sor.u32 %s97, %s98
      %p100 = scmp.eq.s32.totalorder %s99, 0
      %s102 = sadd.s32 %s101, 1
      %s103 = scalar_select %p100, %s101, %s102
      %p106 = pneg %p100
      %p107 = scmp.eq.s32.totalorder %s12, 3
      %p108 = por %p106, %p107
      %p109 = scmp.ne.s32.totalorder %s101, %s104
      %p110 = scmp.eq.s32.totalorder %s12, 0
      %p111 = por %p109, %p110
      %p112 = scmp.ne.s32.totalorder %s101, %s104
      %p113 = scmp.eq.s32.totalorder %s17, 3
      %p114 = por %p112, %p113
      %p115 = scmp.ne.s32.totalorder %s104, %s105
      %p116 = scmp.eq.s32.totalorder %s17, 0
      %p117 = por %p115, %p116
      %p118 = scmp.ne.s32.totalorder %s104, %s105
      %p119 = scmp.eq.s32.totalorder %s18, 3
      %p120 = por %p118, %p119
      %p122 = scmp.ne.s32.totalorder %s105, %s121
      %p123 = scmp.eq.s32.totalorder %s18, 0
      %p124 = por %p122, %p123
      %s125 = ssub.s32 %s19, %s38
      %s126 = ssub.s32 %s21, %s30
      %s127 = sor.u32 %s125, %s126
      %s128 = ssub.s32 %s20, %s34
      %s129 = sor.u32 %s127, %s128
      %p130 = scmp.eq.s32.totalorder %s129, 0
      %s132 = sadd.s32 %s131, 1
      %s133 = scalar_select %p130, %s131, %s132
      %p136 = pneg %p130
      %p137 = scmp.eq.s32.totalorder %s12, 3
      %p138 = por %p136, %p137
      %p139 = scmp.ne.s32.totalorder %s131, %s134
      %p140 = scmp.eq.s32.totalorder %s12, 0
      %p141 = por %p139, %p140
      %p142 = scmp.ne.s32.totalorder %s131, %s134
      %p143 = scmp.eq.s32.totalorder %s17, 3
      %p144 = por %p142, %p143
      %p145 = scmp.ne.s32.totalorder %s134, %s135
      %p146 = scmp.eq.s32.totalorder %s17, 0
      %p147 = por %p145, %p146
      %p148 = scmp.ne.s32.totalorder %s134, %s135
      %p149 = scmp.eq.s32.totalorder %s18, 3
      %p150 = por %p148, %p149
      %p152 = scmp.ne.s32.totalorder %s135, %s151
      %p153 = scmp.eq.s32.totalorder %s18, 0
      %p154 = por %p152, %p153
      %p155 = scmp.le.s32.totalorder 1, %s12
      %p156 = scmp.lt.s32.totalorder %s12, 5
      %p157 = pnand %p155, %p156
      %p158 = pneg %p157
      // Predicated region
      $region9: #{tpu_custom_call.1} parent=5 // pred_check
        _
      $region10: #{tpu_custom_call.1} parent=5 // pred_check_branch
        %160 = sbr.rel (%p157) target = $region12
      $region11: #{tpu_custom_call.1} parent=5 // pred_region
        %s161 = ssub.s32 %s12, 1
      $region12: #{tpu_custom_call.1} parent=5 // pred_fallthru
        _
      %p162 = scmp.lt.s32.totalorder %s12, 4
      // Predicated region
      $region13: #{tpu_custom_call.1} parent=5 // pred_check
        %p163 = pneg %p162
      $region14: #{tpu_custom_call.1} parent=5 // pred_check_branch
        %165 = sbr.rel (%p163) target = $region16
      $region15: #{tpu_custom_call.1} parent=5 // pred_region
        // Predicated region
        $region17: #{tpu_custom_call.1} parent=15 // pred_check
          %p166 = pneg %p55
        $region18: #{tpu_custom_call.1} parent=15 // pred_check_branch
          %168 = sbr.rel (%p166) target = $region20
        $region19: #{tpu_custom_call.1} parent=15 // pred_region
          %s169 = sand.u32 %s45, 1
          %s170 = sand.u32 %s45, 1
          %s171 = smul.addr %s170, 32
          %s172 = scalar_lea.vmem [#allocation2], %s171
          %s173 = smul.u32 4, %s20
          %s174 = smul.addr %s173, 2
          %s175 = sadd.s32 %s21, %s174
          %s176 = smul.addr %s19, 8
          %s177 = sadd.s32 %s175, %s176
          %s178 = smul.addr %s177, 8
          %s179 = scalar_lea.vmem %s0, %s178
          // Predicated region
          $region21: #{tpu_custom_call.1} parent=19 // pred_check
            _
          $region22: #{tpu_custom_call.1} parent=19 // pred_check_branch
            %181 = sbr.rel (0) target = $region24
          $region23: #{tpu_custom_call.1} parent=19 // pred_region
            // Predicated region
            $region25: #{tpu_custom_call.1} parent=23 // pred_check
              _
            $region26: #{tpu_custom_call.1} parent=23 // pred_check_branch
              %183 = sbr.rel (0) target = $region28
            $region27: #{tpu_custom_call.1} parent=23 // pred_region
              // Predicated region
              $region40: #{tpu_custom_call.1} parent=27 // pred_check
                _
              $region41: #{tpu_custom_call.1} parent=27 // pred_check_branch
                %204 = sbr.rel (0) target = $region43
              $region42: #{tpu_custom_call.1} parent=27 // pred_region
                loop: start=0, step=1, limit=1
                $region44: #{tpu_custom_call.1} parent=42 // loop_pre_header
                  _
                $region45: #{tpu_custom_call.1} parent=42 // loop_header
                  %s206 = sphi 0, %s210
                  %p207 = scmp.ge.s32.totalorder %s206, 1
                  %s211 = sphi %s179, %s179
                  %s212 = sphi %s172, %s172
                $region46: #{tpu_custom_call.1} parent=42 // loop_header_branch
                  %209 = sbr.rel (%p207) target = $region50
                $region47: #{tpu_custom_call.1} parent=42 // loop_body
                  %v213 = vld [vmem:[%s211] sm:$0xff]
                  %214 = vst [vmem:[%s212] sm:$0xff] %v213
                  %v215 = vld [vmem:[%s211 + $0x10] sm:$0xff]
                  %216 = vst [vmem:[%s212 + $0x8] sm:$0xff] %v215
                  %v217 = vld [vmem:[%s211 + $0x20] sm:$0xff]
                  %218 = vst [vmem:[%s212 + $0x10] sm:$0xff] %v217
                  %v219 = vld [vmem:[%s211 + $0x30] sm:$0xff]
                  %220 = vst [vmem:[%s212 + $0x18] sm:$0xff] %v219
                $region48: #{tpu_custom_call.1} parent=42 // loop_footer
                  %s210 = sadd.s32 1, %s206
                $region49: #{tpu_custom_call.1} parent=42 // loop_footer_branch
                  %205 = sbr.rel target = $region45
                $region50: #{tpu_custom_call.1} parent=42 // loop_exit
                  _
              $region43: #{tpu_custom_call.1} parent=27 // pred_fallthru
                _
              // Predicated region
              $region51: #{tpu_custom_call.1} parent=27 // pred_check
                _
              $region52: #{tpu_custom_call.1} parent=27 // pred_check_branch
                %222 = sbr.rel target = $region54
              $region53: #{tpu_custom_call.1} parent=27 // pred_region
                _
              $region54: #{tpu_custom_call.1} parent=27 // pred_fallthru
                _
            $region28: #{tpu_custom_call.1} parent=23 // pred_fallthru
              _
            // Predicated region
            $region29: #{tpu_custom_call.1} parent=23 // pred_check
              _
            $region30: #{tpu_custom_call.1} parent=23 // pred_check_branch
              %185 = sbr.rel target = $region32
            $region31: #{tpu_custom_call.1} parent=23 // pred_region
              loop: start=0, step=1, limit=1
              $region33: #{tpu_custom_call.1} parent=31 // loop_pre_header
                _
              $region34: #{tpu_custom_call.1} parent=31 // loop_header
                %s188 = sphi 0, %s192
                %p189 = scmp.ge.s32.totalorder %s188, 1
                %s193 = sphi %s179, %s179
                %s194 = sphi %s172, %s172
              $region35: #{tpu_custom_call.1} parent=31 // loop_header_branch
                %191 = sbr.rel (%p189) target = $region39
              $region36: #{tpu_custom_call.1} parent=31 // loop_body
                %v195 = vld [vmem:[%s193] sm:$0xff]
                %196 = vst [vmem:[%s194] sm:$0xff] %v195
                %v197 = vld [vmem:[%s193 + $0x10] sm:$0xff]
                %198 = vst [vmem:[%s194 + $0x8] sm:$0xff] %v197
                %v199 = vld [vmem:[%s193 + $0x20] sm:$0xff]
                %200 = vst [vmem:[%s194 + $0x10] sm:$0xff] %v199
                %v201 = vld [vmem:[%s193 + $0x30] sm:$0xff]
                %202 = vst [vmem:[%s194 + $0x18] sm:$0xff] %v201
              $region37: #{tpu_custom_call.1} parent=31 // loop_footer
                %s192 = sadd.s32 1, %s188
              $region38: #{tpu_custom_call.1} parent=31 // loop_footer_branch
                %187 = sbr.rel target = $region34
              $region39: #{tpu_custom_call.1} parent=31 // loop_exit
                _
            $region32: #{tpu_custom_call.1} parent=23 // pred_fallthru
              _
          $region24: #{tpu_custom_call.1} parent=19 // pred_fallthru
            _
          %223 = vnop
        $region20: #{tpu_custom_call.1} parent=15 // pred_fallthru
          _
        // Predicated region
        $region55: #{tpu_custom_call.1} parent=15 // pred_check
          %p224 = pneg %p83
        $region56: #{tpu_custom_call.1} parent=15 // pred_check_branch
          %226 = sbr.rel (%p224) target = $region58
        $region57: #{tpu_custom_call.1} parent=15 // pred_region
          %s227 = smul.u32 4, %s20
          %p228 = scmp.lt.s32.totalorder %s19, 1
          %s229 = scalar_select %p228, %s19, 1
          %p230 = scmp.lt.s32.totalorder %s227, 3
          %s231 = scalar_select %p230, %s227, 3
          %s232 = smul.addr %s231, 2
          %s233 = smul.addr %s229, 8
          %s234 = sadd.s32 %s232, %s233
          %s235 = smul.addr %s234, 8
          %s236 = scalar_lea.vmem %s1, %s235
          %s237 = smul.u32 4, %s20
        $region58: #{tpu_custom_call.1} parent=15 // pred_fallthru
          _
        // Predicated region
        $region59: #{tpu_custom_call.1} parent=15 // pred_check
          %p238 = pneg %p111
        $region60: #{tpu_custom_call.1} parent=15 // pred_check_branch
          %240 = sbr.rel (%p238) target = $region62
        $region61: #{tpu_custom_call.1} parent=15 // pred_region
          %s241 = smul.u32 4, %s20
          %p242 = scmp.lt.s32.totalorder %s19, 1
          %s243 = scalar_select %p242, %s19, 1
          %p244 = scmp.lt.s32.totalorder %s241, 3
          %s245 = scalar_select %p244, %s241, 3
          %s246 = smul.addr %s245, 2
          %s247 = smul.addr %s243, 8
          %s248 = sadd.s32 %s246, %s247
          %s249 = smul.addr %s248, 8
          %s250 = scalar_lea.vmem %s2, %s249
          %s251 = smul.u32 4, %s20
        $region62: #{tpu_custom_call.1} parent=15 // pred_fallthru
          _
      $region16: #{tpu_custom_call.1} parent=5 // pred_fallthru
        _
      %p252 = scmp.le.s32.totalorder 1, %s12
      %p253 = scmp.lt.s32.totalorder %s12, 5
      %p254 = pnand %p252, %p253
      %p255 = pneg %p254
      // Predicated region
      $region63: #{tpu_custom_call.1} parent=5 // pred_check
        _
      $region64: #{tpu_custom_call.1} parent=5 // pred_check_branch
        %257 = sbr.rel (%p254) target = $region66
      $region65: #{tpu_custom_call.1} parent=5 // pred_region
        %s258 = ssub.s32 %s12, 1
        %s259 = sand.u32 %s48, 1
        %s260 = sand.u32 %s48, 1
        %s261 = smul.addr %s260, 32
        %s262 = scalar_lea.vmem [#allocation2], %s261
        // Predicated region
        $region67: #{tpu_custom_call.1} parent=65 // pred_check
          %p263 = pneg %p61
        $region68: #{tpu_custom_call.1} parent=65 // pred_check_branch
          %265 = sbr.rel (%p263) target = $region70
        $region69: #{tpu_custom_call.1} parent=65 // pred_region
          _
        $region70: #{tpu_custom_call.1} parent=65 // pred_fallthru
          _
        %s266 = sand.u32 %s48, 1
        %s267 = sand.u32 %s48, 1
        %s268 = smul.addr %s267, 32
        %s269 = scalar_lea.vmem [#allocation2], %s268
        %p270 = pneg %p61
        %p271 = pneg %p58
        %s272 = smul.u32 4, %s23
        %p273 = scmp.lt.s32.totalorder %s22, 1
        %s274 = scalar_select %p273, %s22, 1
        %p275 = scmp.lt.s32.totalorder %s272, 3
        %s276 = scalar_select %p275, %s272, 3
        %s277 = smul.addr %s276, 2
        %s278 = smul.addr %s274, 8
        %s279 = sadd.s32 %s277, %s278
        %s280 = smul.addr %s279, 8
        %s281 = scalar_lea.vmem %s1, %s280
        %p282 = pneg %p89
        %p283 = pneg %p86
        %s284 = smul.u32 4, %s23
        %p285 = scmp.lt.s32.totalorder %s22, 1
        %s286 = scalar_select %p285, %s22, 1
        %p287 = scmp.lt.s32.totalorder %s284, 3
        %s288 = scalar_select %p287, %s284, 3
        %s289 = smul.addr %s288, 2
        %s290 = smul.addr %s286, 8
        %s291 = sadd.s32 %s289, %s290
        %s292 = smul.addr %s291, 8
        %s293 = scalar_lea.vmem %s2, %s292
        %p294 = pneg %p117
        %p295 = pneg %p114
        %p296 = pneg %p147
        %p297 = pneg %p144
        %s298 = sand.u32 %s134, 1
        %s299 = scalar_lea.sflag [#allocation4], %s298
        %s300 = sand.u32 %s134, 1
        %s301 = smul.addr %s300, 8
        %s302 = scalar_lea.vmem [#allocation3], %s301
        %s303 = smul.u32 4, %s23
        %s304 = smul.u32 4, %s23
        %p305 = scmp.lt.s32.totalorder %s22, 1
        %s306 = scalar_select %p305, %s22, 1
        %p307 = scmp.lt.s32.totalorder %s304, 3
        %s308 = scalar_select %p307, %s304, 3
        %s309 = smul.addr %s308, 2
        %s310 = smul.addr %s306, 8
        %s311 = sadd.s32 %s309, %s310
        %s312 = smul.addr %s311, 8
        %s313 = scalar_lea.vmem %s1, %s312
        %s314 = smul.u32 4, %s23
        %s315 = smul.u32 4, %s23
        %p316 = scmp.lt.s32.totalorder %s22, 1
        %s317 = scalar_select %p316, %s22, 1
        %p318 = scmp.lt.s32.totalorder %s315, 3
        %s319 = scalar_select %p318, %s315, 3
        %s320 = smul.addr %s319, 2
        %s321 = smul.addr %s317, 8
        %s322 = sadd.s32 %s320, %s321
        %s323 = smul.addr %s322, 8
        %s324 = scalar_lea.vmem %s2, %s323
        %s325 = smul.u32 4, %s23
        %v326 = vld [vmem:[%s262] sm:$0xff]
        %v327 = vld [vmem:[%s262 + $0x8] sm:$0xff]
        %v328 = vld [vmem:[%s262 + $0x10] sm:$0xff]
        %v329 = vld [vmem:[%s262 + $0x18] sm:$0xff]
        %v330 = vld [vmem:[%s313] sm:$0xff]
        %v331 = vld [vmem:[%s313 + $0x8] sm:$0xff]
        %v332 = vld [vmem:[%s313 + $0x10] sm:$0xff]
        %v333 = vld [vmem:[%s313 + $0x18] sm:$0xff]
        %v334 = vld [vmem:[%s313 + $0x20] sm:$0xff]
        %v335 = vld [vmem:[%s313 + $0x28] sm:$0xff]
        %v336 = vld [vmem:[%s313 + $0x30] sm:$0xff]
        %v337 = vld [vmem:[%s313 + $0x38] sm:$0xff]
        %v338 = vld [vmem:[%s324] sm:$0xff]
        %v339 = vld [vmem:[%s324 + $0x8] sm:$0xff]
        %v340 = vld [vmem:[%s324 + $0x10] sm:$0xff]
        %v341 = vld [vmem:[%s324 + $0x18] sm:$0xff]
        %v342 = vld [vmem:[%s324 + $0x20] sm:$0xff]
        %v343 = vld [vmem:[%s324 + $0x28] sm:$0xff]
        %v344 = vld [vmem:[%s324 + $0x30] sm:$0xff]
        %v345 = vld [vmem:[%s324 + $0x38] sm:$0xff]
        %vm346 = vcmask 64512
        %v348 = vsel %vm346, %v326, 0
        %v351 = vsel %vm346, %v330, 0
        %v354 = vsel %vm346, %v331, 0
        %356 = vmatprep.subr.mxu0 0.0
        %357 = vmatpush1.xpose.msra.mxu0 %v351
        %358 = vmatprep.subr.mxu0 0.0
        %359 = vmatpush1.xpose.msra.mxu0 %v354
        %360 = vmatprep.subr.mxu0 0.0
        %361 = vmatpush1.xpose.msra.mxu0 0.0
        %362 = vmatprep.subr.mxu0 0.0
        %363 = vmatpush1.xpose.msra.mxu0 0.0
        %364 = vmatprep.subr.mxu0 0.0
        %365 = vmatpush1.xpose.msra.mxu0 0.0
        %366 = vmatprep.subr.mxu0 0.0
        %367 = vmatpush1.xpose.msra.mxu0 0.0
        %368 = vmatprep.subr.mxu0 0.0
        %369 = vmatpush1.xpose.msra.mxu0 0.0
        %370 = vmatprep.subr.mxu0 0.0
        %371 = vmatpush1.xpose.msra.mxu0 0.0
        %372 = vmatprep.subr.mxu0 0.0
        %373 = vmatpush1.xpose.msra.mxu0 0.0
        %374 = vmatprep.subr.mxu0 0.0
        %375 = vmatpush1.xpose.msra.mxu0 0.0
        %376 = vmatprep.subr.mxu0 0.0
        %377 = vmatpush1.xpose.msra.mxu0 0.0
        %378 = vmatprep.subr.mxu0 0.0
        %379 = vmatpush1.xpose.msra.mxu0 0.0
        %380 = vmatprep.subr.mxu0 0.0
        %381 = vmatpush1.xpose.msra.mxu0 0.0
        %382 = vmatprep.subr.mxu0 0.0
        %383 = vmatpush1.xpose.msra.mxu0 0.0
        %384 = vmatprep.subr.mxu0 0.0
        %385 = vmatpush1.xpose.msra.mxu0 0.0
        %386 = vmatprep.subr.mxu0 0.0
        %387 = vmatpush1.xpose.msra.mxu0 0.0
        %388 = vmatprep.subr.mxu0 0.0
        %389 = vmatpush1.xpose.msra.mxu0 0.0
        %390 = vmatprep.subr.mxu0 0.0
        %391 = vmatpush1.xpose.msra.mxu0 0.0
        %392 = vmatprep.subr.mxu0 0.0
        %393 = vmatpush1.xpose.msra.mxu0 0.0
        %394 = vmatprep.subr.mxu0 0.0
        %395 = vmatpush1.xpose.msra.mxu0 0.0
        %396 = vmatprep.subr.mxu0 0.0
        %397 = vmatpush1.xpose.msra.mxu0 0.0
        %398 = vmatprep.subr.mxu0 0.0
        %399 = vmatpush1.xpose.msra.mxu0 0.0
        %400 = vmatprep.subr.mxu0 0.0
        %401 = vmatpush1.xpose.msra.mxu0 0.0
        %402 = vmatprep.subr.mxu0 0.0
        %403 = vmatpush1.xpose.msra.mxu0 0.0
        %404 = vmatprep.subr.mxu0 0.0
        %405 = vmatpush1.xpose.msra.mxu0 0.0
        %406 = vmatprep.subr.mxu0 0.0
        %407 = vmatpush1.xpose.msra.mxu0 0.0
        %408 = vmatprep.subr.mxu0 0.0
        %409 = vmatpush1.xpose.msra.mxu0 0.0
        %410 = vmatprep.subr.mxu0 0.0
        %411 = vmatpush1.xpose.msra.mxu0 0.0
        %412 = vmatprep.subr.mxu0 0.0
        %413 = vmatpush1.xpose.msra.mxu0 0.0
        %414 = vmatprep.subr.mxu0 0.0
        %415 = vmatpush1.xpose.msra.mxu0 0.0
        %416 = vmatprep.subr.mxu0 0.0
        %417 = vmatpush1.xpose.msra.mxu0 0.0
        %418 = vmatprep.subr.mxu0 0.0
        %419 = vmatpush1.xpose.msra.mxu0 0.0
        %420 = vmatprep.mubr.f32.mxu0 0.0
        %421 = vmatmul.mubr.f32.gmra.mrb[0].mxu0 %v348
        %v422 = vpop.f32.mrb[0].mxu0
        %v423 = vadd.f32 0.0, %v422
        %v424 = vpop.f32.mrb[0].mxu0
        %425 = vdwg.mxu0
        %v427 = vsel %vm346, %v327, 0
        %v430 = vsel %vm346, %v332, 0
        %v433 = vsel %vm346, %v333, 0
        %435 = vmatprep.subr.mxu0 0.0
        %436 = vmatpush1.xpose.msra.mxu0 %v430
        %437 = vmatprep.subr.mxu0 0.0
        %438 = vmatpush1.xpose.msra.mxu0 %v433
        %439 = vmatprep.subr.mxu0 0.0
        %440 = vmatpush1.xpose.msra.mxu0 0.0
        %441 = vmatprep.subr.mxu0 0.0
        %442 = vmatpush1.xpose.msra.mxu0 0.0
        %443 = vmatprep.subr.mxu0 0.0
        %444 = vmatpush1.xpose.msra.mxu0 0.0
        %445 = vmatprep.subr.mxu0 0.0
        %446 = vmatpush1.xpose.msra.mxu0 0.0
        %447 = vmatprep.subr.mxu0 0.0
        %448 = vmatpush1.xpose.msra.mxu0 0.0
        %449 = vmatprep.subr.mxu0 0.0
        %450 = vmatpush1.xpose.msra.mxu0 0.0
        %451 = vmatprep.subr.mxu0 0.0
        %452 = vmatpush1.xpose.msra.mxu0 0.0
        %453 = vmatprep.subr.mxu0 0.0
        %454 = vmatpush1.xpose.msra.mxu0 0.0
        %455 = vmatprep.subr.mxu0 0.0
        %456 = vmatpush1.xpose.msra.mxu0 0.0
        %457 = vmatprep.subr.mxu0 0.0
        %458 = vmatpush1.xpose.msra.mxu0 0.0
        %459 = vmatprep.subr.mxu0 0.0
        %460 = vmatpush1.xpose.msra.mxu0 0.0
        %461 = vmatprep.subr.mxu0 0.0
        %462 = vmatpush1.xpose.msra.mxu0 0.0
        %463 = vmatprep.subr.mxu0 0.0
        %464 = vmatpush1.xpose.msra.mxu0 0.0
        %465 = vmatprep.subr.mxu0 0.0
        %466 = vmatpush1.xpose.msra.mxu0 0.0
        %467 = vmatprep.subr.mxu0 0.0
        %468 = vmatpush1.xpose.msra.mxu0 0.0
        %469 = vmatprep.subr.mxu0 0.0
        %470 = vmatpush1.xpose.msra.mxu0 0.0
        %471 = vmatprep.subr.mxu0 0.0
        %472 = vmatpush1.xpose.msra.mxu0 0.0
        %473 = vmatprep.subr.mxu0 0.0
        %474 = vmatpush1.xpose.msra.mxu0 0.0
        %475 = vmatprep.subr.mxu0 0.0
        %476 = vmatpush1.xpose.msra.mxu0 0.0
        %477 = vmatprep.subr.mxu0 0.0
        %478 = vmatpush1.xpose.msra.mxu0 0.0
        %479 = vmatprep.subr.mxu0 0.0
        %480 = vmatpush1.xpose.msra.mxu0 0.0
        %481 = vmatprep.subr.mxu0 0.0
        %482 = vmatpush1.xpose.msra.mxu0 0.0
        %483 = vmatprep.subr.mxu0 0.0
        %484 = vmatpush1.xpose.msra.mxu0 0.0
        %485 = vmatprep.subr.mxu0 0.0
        %486 = vmatpush1.xpose.msra.mxu0 0.0
        %487 = vmatprep.subr.mxu0 0.0
        %488 = vmatpush1.xpose.msra.mxu0 0.0
        %489 = vmatprep.subr.mxu0 0.0
        %490 = vmatpush1.xpose.msra.mxu0 0.0
        %491 = vmatprep.subr.mxu0 0.0
        %492 = vmatpush1.xpose.msra.mxu0 0.0
        %493 = vmatprep.subr.mxu0 0.0
        %494 = vmatpush1.xpose.msra.mxu0 0.0
        %495 = vmatprep.subr.mxu0 0.0
        %496 = vmatpush1.xpose.msra.mxu0 0.0
        %497 = vmatprep.subr.mxu0 0.0
        %498 = vmatpush1.xpose.msra.mxu0 0.0
        %499 = vmatprep.mubr.f32.mxu0 0.0
        %500 = vmatmul.mubr.f32.gmra.mrb[0].mxu0 %v427
        %v501 = vpop.f32.mrb[0].mxu0
        %v502 = vadd.f32 0.0, %v501
        %v503 = vpop.f32.mrb[0].mxu0
        %504 = vdwg.mxu0
        %v506 = vsel %vm346, %v328, 0
        %v509 = vsel %vm346, %v334, 0
        %v512 = vsel %vm346, %v335, 0
        %514 = vmatprep.subr.mxu0 0.0
        %515 = vmatpush1.xpose.msra.mxu0 %v509
        %516 = vmatprep.subr.mxu0 0.0
        %517 = vmatpush1.xpose.msra.mxu0 %v512
        %518 = vmatprep.subr.mxu0 0.0
        %519 = vmatpush1.xpose.msra.mxu0 0.0
        %520 = vmatprep.subr.mxu0 0.0
        %521 = vmatpush1.xpose.msra.mxu0 0.0
        %522 = vmatprep.subr.mxu0 0.0
        %523 = vmatpush1.xpose.msra.mxu0 0.0
        %524 = vmatprep.subr.mxu0 0.0
        %525 = vmatpush1.xpose.msra.mxu0 0.0
        %526 = vmatprep.subr.mxu0 0.0
        %527 = vmatpush1.xpose.msra.mxu0 0.0
        %528 = vmatprep.subr.mxu0 0.0
        %529 = vmatpush1.xpose.msra.mxu0 0.0
        %530 = vmatprep.subr.mxu0 0.0
        %531 = vmatpush1.xpose.msra.mxu0 0.0
        %532 = vmatprep.subr.mxu0 0.0
        %533 = vmatpush1.xpose.msra.mxu0 0.0
        %534 = vmatprep.subr.mxu0 0.0
        %535 = vmatpush1.xpose.msra.mxu0 0.0
        %536 = vmatprep.subr.mxu0 0.0
        %537 = vmatpush1.xpose.msra.mxu0 0.0
        %538 = vmatprep.subr.mxu0 0.0
        %539 = vmatpush1.xpose.msra.mxu0 0.0
        %540 = vmatprep.subr.mxu0 0.0
        %541 = vmatpush1.xpose.msra.mxu0 0.0
        %542 = vmatprep.subr.mxu0 0.0
        %543 = vmatpush1.xpose.msra.mxu0 0.0
        %544 = vmatprep.subr.mxu0 0.0
        %545 = vmatpush1.xpose.msra.mxu0 0.0
        %546 = vmatprep.subr.mxu0 0.0
        %547 = vmatpush1.xpose.msra.mxu0 0.0
        %548 = vmatprep.subr.mxu0 0.0
        %549 = vmatpush1.xpose.msra.mxu0 0.0
        %550 = vmatprep.subr.mxu0 0.0
        %551 = vmatpush1.xpose.msra.mxu0 0.0
        %552 = vmatprep.subr.mxu0 0.0
        %553 = vmatpush1.xpose.msra.mxu0 0.0
        %554 = vmatprep.subr.mxu0 0.0
        %555 = vmatpush1.xpose.msra.mxu0 0.0
        %556 = vmatprep.subr.mxu0 0.0
        %557 = vmatpush1.xpose.msra.mxu0 0.0
        %558 = vmatprep.subr.mxu0 0.0
        %559 = vmatpush1.xpose.msra.mxu0 0.0
        %560 = vmatprep.subr.mxu0 0.0
        %561 = vmatpush1.xpose.msra.mxu0 0.0
        %562 = vmatprep.subr.mxu0 0.0
        %563 = vmatpush1.xpose.msra.mxu0 0.0
        %564 = vmatprep.subr.mxu0 0.0
        %565 = vmatpush1.xpose.msra.mxu0 0.0
        %566 = vmatprep.subr.mxu0 0.0
        %567 = vmatpush1.xpose.msra.mxu0 0.0
        %568 = vmatprep.subr.mxu0 0.0
        %569 = vmatpush1.xpose.msra.mxu0 0.0
        %570 = vmatprep.subr.mxu0 0.0
        %571 = vmatpush1.xpose.msra.mxu0 0.0
        %572 = vmatprep.subr.mxu0 0.0
        %573 = vmatpush1.xpose.msra.mxu0 0.0
        %574 = vmatprep.subr.mxu0 0.0
        %575 = vmatpush1.xpose.msra.mxu0 0.0
        %576 = vmatprep.subr.mxu0 0.0
        %577 = vmatpush1.xpose.msra.mxu0 0.0
        %578 = vmatprep.mubr.f32.mxu0 0.0
        %579 = vmatmul.mubr.f32.gmra.mrb[0].mxu0 %v506
        %v580 = vpop.f32.mrb[0].mxu0
        %v581 = vadd.f32 0.0, %v580
        %v582 = vpop.f32.mrb[0].mxu0
        %583 = vdwg.mxu0
        %v585 = vsel %vm346, %v329, 0
        %v588 = vsel %vm346, %v336, 0
        %v591 = vsel %vm346, %v337, 0
        %593 = vmatprep.subr.mxu0 0.0
        %594 = vmatpush1.xpose.msra.mxu0 %v588
        %595 = vmatprep.subr.mxu0 0.0
        %596 = vmatpush1.xpose.msra.mxu0 %v591
        %597 = vmatprep.subr.mxu0 0.0
        %598 = vmatpush1.xpose.msra.mxu0 0.0
        %599 = vmatprep.subr.mxu0 0.0
        %600 = vmatpush1.xpose.msra.mxu0 0.0
        %601 = vmatprep.subr.mxu0 0.0
        %602 = vmatpush1.xpose.msra.mxu0 0.0
        %603 = vmatprep.subr.mxu0 0.0
        %604 = vmatpush1.xpose.msra.mxu0 0.0
        %605 = vmatprep.subr.mxu0 0.0
        %606 = vmatpush1.xpose.msra.mxu0 0.0
        %607 = vmatprep.subr.mxu0 0.0
        %608 = vmatpush1.xpose.msra.mxu0 0.0
        %609 = vmatprep.subr.mxu0 0.0
        %610 = vmatpush1.xpose.msra.mxu0 0.0
        %611 = vmatprep.subr.mxu0 0.0
        %612 = vmatpush1.xpose.msra.mxu0 0.0
        %613 = vmatprep.subr.mxu0 0.0
        %614 = vmatpush1.xpose.msra.mxu0 0.0
        %615 = vmatprep.subr.mxu0 0.0
        %616 = vmatpush1.xpose.msra.mxu0 0.0
        %617 = vmatprep.subr.mxu0 0.0
        %618 = vmatpush1.xpose.msra.mxu0 0.0
        %619 = vmatprep.subr.mxu0 0.0
        %620 = vmatpush1.xpose.msra.mxu0 0.0
        %621 = vmatprep.subr.mxu0 0.0
        %622 = vmatpush1.xpose.msra.mxu0 0.0
        %623 = vmatprep.subr.mxu0 0.0
        %624 = vmatpush1.xpose.msra.mxu0 0.0
        %625 = vmatprep.subr.mxu0 0.0
        %626 = vmatpush1.xpose.msra.mxu0 0.0
        %627 = vmatprep.subr.mxu0 0.0
        %628 = vmatpush1.xpose.msra.mxu0 0.0
        %629 = vmatprep.subr.mxu0 0.0
        %630 = vmatpush1.xpose.msra.mxu0 0.0
        %631 = vmatprep.subr.mxu0 0.0
        %632 = vmatpush1.xpose.msra.mxu0 0.0
        %633 = vmatprep.subr.mxu0 0.0
        %634 = vmatpush1.xpose.msra.mxu0 0.0
        %635 = vmatprep.subr.mxu0 0.0
        %636 = vmatpush1.xpose.msra.mxu0 0.0
        %637 = vmatprep.subr.mxu0 0.0
        %638 = vmatpush1.xpose.msra.mxu0 0.0
        %639 = vmatprep.subr.mxu0 0.0
        %640 = vmatpush1.xpose.msra.mxu0 0.0
        %641 = vmatprep.subr.mxu0 0.0
        %642 = vmatpush1.xpose.msra.mxu0 0.0
        %643 = vmatprep.subr.mxu0 0.0
        %644 = vmatpush1.xpose.msra.mxu0 0.0
        %645 = vmatprep.subr.mxu0 0.0
        %646 = vmatpush1.xpose.msra.mxu0 0.0
        %647 = vmatprep.subr.mxu0 0.0
        %648 = vmatpush1.xpose.msra.mxu0 0.0
        %649 = vmatprep.subr.mxu0 0.0
        %650 = vmatpush1.xpose.msra.mxu0 0.0
        %651 = vmatprep.subr.mxu0 0.0
        %652 = vmatpush1.xpose.msra.mxu0 0.0
        %653 = vmatprep.subr.mxu0 0.0
        %654 = vmatpush1.xpose.msra.mxu0 0.0
        %655 = vmatprep.subr.mxu0 0.0
        %656 = vmatpush1.xpose.msra.mxu0 0.0
        %657 = vmatprep.mubr.f32.mxu0 0.0
        %658 = vmatmul.mubr.f32.gmra.mrb[0].mxu0 %v585
        %v659 = vpop.f32.mrb[0].mxu0
        %v660 = vadd.f32 0.0, %v659
        %v661 = vpop.f32.mrb[0].mxu0
        %662 = vdwg.mxu0
        %s663 = smul.u32 %s24, 8
        %v664 = vlaneseq
        %v665 = vshrl.u32 %v664, 7
        %v666 = vstv %s663
        %v667 = vadd.s32 %v666, %v665
        %v668 = vlaneseq
        %v669 = vand.u32 %v668, 127
        %vm670 = vcmp.le.s32.totalorder %v669, %v667
        %v671 = vsel %vm670, 1, 0
        %vm672 = vcmp.eq.s32.totalorder %v671, 1
        %v673 = vsel %vm672, %v423, -3.4028235e+38
        %v674 = vsel %vm672, %v502, -3.4028235e+38
        %v675 = vsel %vm672, %v581, -3.4028235e+38
        %v676 = vsel %vm672, %v660, -3.4028235e+38
        %vm677 = vcmask 130048
        %v678 = vsel %vm677, %v673, -inf
        %679 = vmax.xlane.f32.xlu0 %v678
        %v680 = vpop.xlane.xlu0 %679
        %v681 = vsel %vm677, %v674, -inf
        %682 = vmax.xlane.f32.xlu0 %v681
        %v683 = vpop.xlane.xlu0 %682
        %v684 = vsel %vm677, %v675, -inf
        %685 = vmax.xlane.f32.xlu0 %v684
        %v686 = vpop.xlane.xlu0 %685
        %v687 = vsel %vm677, %v676, -inf
        %688 = vmax.xlane.f32.xlu0 %v687
        %v689 = vpop.xlane.xlu0 %688
        %v690 = vsub.f32 %v673, %v680
        %v691 = vsub.f32 %v674, %v683
        %v692 = vsub.f32 %v675, %v686
        %v693 = vsub.f32 %v676, %v689
        %v694 = vmul.f32 %v690, 1.442695
        %v695 = vpow.pop %v694
        %v696 = vmul.f32 %v691, 1.442695
        %v697 = vpow.pop %v696
        %v698 = vmul.f32 %v692, 1.442695
        %v699 = vpow.pop %v698
        %v700 = vmul.f32 %v693, 1.442695
        %v701 = vpow.pop %v700
        %v702 = vsel %vm677, %v695, 0.0
        %703 = vadd.xlane.f32.xlu0 %v702
        %v704 = vpop.xlane.xlu0 %703
        %v705 = vsel %vm677, %v697, 0.0
        %706 = vadd.xlane.f32.xlu0 %v705
        %v707 = vpop.xlane.xlu0 %706
        %v708 = vsel %vm677, %v699, 0.0
        %709 = vadd.xlane.f32.xlu0 %v708
        %v710 = vpop.xlane.xlu0 %709
        %v711 = vsel %vm677, %v701, 0.0
        %712 = vadd.xlane.f32.xlu0 %v711
        %v713 = vpop.xlane.xlu0 %712
        %v714 = vrcp.pop %v704
        %v715 = vmul.f32 %v695, %v714
        %v716 = vrcp.pop %v707
        %v717 = vmul.f32 %v697, %v716
        %v718 = vrcp.pop %v710
        %v719 = vmul.f32 %v699, %v718
        %v720 = vrcp.pop %v713
        %v721 = vmul.f32 %v701, %v720
        %v723 = vsel %vm677, %v715, 0
        %725 = vmatprep.subr.mxu0 0.0
        %726 = vmatpush1.msra.mxu0 %v338
        %727 = vmatprep.subr.mxu0 0.0
        %728 = vmatpush1.msra.mxu0 %v339
        %729 = vmatprep.subr.mxu0 0.0
        %730 = vmatpush1.msra.mxu0 0.0
        %731 = vmatprep.subr.mxu0 0.0
        %732 = vmatpush1.msra.mxu0 0.0
        %733 = vmatprep.subr.mxu0 0.0
        %734 = vmatpush1.msra.mxu0 0.0
        %735 = vmatprep.subr.mxu0 0.0
        %736 = vmatpush1.msra.mxu0 0.0
        %737 = vmatprep.subr.mxu0 0.0
        %738 = vmatpush1.msra.mxu0 0.0
        %739 = vmatprep.subr.mxu0 0.0
        %740 = vmatpush1.msra.mxu0 0.0
        %741 = vmatprep.subr.mxu0 0.0
        %742 = vmatpush1.msra.mxu0 0.0
        %743 = vmatprep.subr.mxu0 0.0
        %744 = vmatpush1.msra.mxu0 0.0
        %745 = vmatprep.subr.mxu0 0.0
        %746 = vmatpush1.msra.mxu0 0.0
        %747 = vmatprep.subr.mxu0 0.0
        %748 = vmatpush1.msra.mxu0 0.0
        %749 = vmatprep.subr.mxu0 0.0
        %750 = vmatpush1.msra.mxu0 0.0
        %751 = vmatprep.subr.mxu0 0.0
        %752 = vmatpush1.msra.mxu0 0.0
        %753 = vmatprep.subr.mxu0 0.0
        %754 = vmatpush1.msra.mxu0 0.0
        %755 = vmatprep.subr.mxu0 0.0
        %756 = vmatpush1.msra.mxu0 0.0
        %757 = vmatprep.subr.mxu0 0.0
        %758 = vmatpush1.msra.mxu0 0.0
        %759 = vmatprep.subr.mxu0 0.0
        %760 = vmatpush1.msra.mxu0 0.0
        %761 = vmatprep.subr.mxu0 0.0
        %762 = vmatpush1.msra.mxu0 0.0
        %763 = vmatprep.subr.mxu0 0.0
        %764 = vmatpush1.msra.mxu0 0.0
        %765 = vmatprep.subr.mxu0 0.0
        %766 = vmatpush1.msra.mxu0 0.0
        %767 = vmatprep.subr.mxu0 0.0
        %768 = vmatpush1.msra.mxu0 0.0
        %769 = vmatprep.subr.mxu0 0.0
        %770 = vmatpush1.msra.mxu0 0.0
        %771 = vmatprep.subr.mxu0 0.0
        %772 = vmatpush1.msra.mxu0 0.0
        %773 = vmatprep.subr.mxu0 0.0
        %774 = vmatpush1.msra.mxu0 0.0
        %775 = vmatprep.subr.mxu0 0.0
        %776 = vmatpush1.msra.mxu0 0.0
        %777 = vmatprep.subr.mxu0 0.0
        %778 = vmatpush1.msra.mxu0 0.0
        %779 = vmatprep.subr.mxu0 0.0
        %780 = vmatpush1.msra.mxu0 0.0
        %781 = vmatprep.subr.mxu0 0.0
        %782 = vmatpush1.msra.mxu0 0.0
        %783 = vmatprep.subr.mxu0 0.0
        %784 = vmatpush1.msra.mxu0 0.0
        %785 = vmatprep.subr.mxu0 0.0
        %786 = vmatpush1.msra.mxu0 0.0
        %787 = vmatprep.subr.mxu0 0.0
        %788 = vmatpush1.msra.mxu0 0.0
        %789 = vmatprep.mubr.f32.mxu0 0.0
        %790 = vmatmul.mubr.f32.gmra.mrb[0].mxu0 %v723
        %v791 = vpop.f32.mrb[0].mxu0
        %v792 = vadd.f32 0.0, %v791
        %v793 = vpop.f32.mrb[0].mxu0
        %794 = vdwg.mxu0
        %v796 = vsel %vm677, %v717, 0
        %798 = vmatprep.subr.mxu0 0.0
        %799 = vmatpush1.msra.mxu0 %v340
        %800 = vmatprep.subr.mxu0 0.0
        %801 = vmatpush1.msra.mxu0 %v341
        %802 = vmatprep.subr.mxu0 0.0
        %803 = vmatpush1.msra.mxu0 0.0
        %804 = vmatprep.subr.mxu0 0.0
        %805 = vmatpush1.msra.mxu0 0.0
        %806 = vmatprep.subr.mxu0 0.0
        %807 = vmatpush1.msra.mxu0 0.0
        %808 = vmatprep.subr.mxu0 0.0
        %809 = vmatpush1.msra.mxu0 0.0
        %810 = vmatprep.subr.mxu0 0.0
        %811 = vmatpush1.msra.mxu0 0.0
        %812 = vmatprep.subr.mxu0 0.0
        %813 = vmatpush1.msra.mxu0 0.0
        %814 = vmatprep.subr.mxu0 0.0
        %815 = vmatpush1.msra.mxu0 0.0
        %816 = vmatprep.subr.mxu0 0.0
        %817 = vmatpush1.msra.mxu0 0.0
        %818 = vmatprep.subr.mxu0 0.0
        %819 = vmatpush1.msra.mxu0 0.0
        %820 = vmatprep.subr.mxu0 0.0
        %821 = vmatpush1.msra.mxu0 0.0
        %822 = vmatprep.subr.mxu0 0.0
        %823 = vmatpush1.msra.mxu0 0.0
        %824 = vmatprep.subr.mxu0 0.0
        %825 = vmatpush1.msra.mxu0 0.0
        %826 = vmatprep.subr.mxu0 0.0
        %827 = vmatpush1.msra.mxu0 0.0
        %828 = vmatprep.subr.mxu0 0.0
        %829 = vmatpush1.msra.mxu0 0.0
        %830 = vmatprep.subr.mxu0 0.0
        %831 = vmatpush1.msra.mxu0 0.0
        %832 = vmatprep.subr.mxu0 0.0
        %833 = vmatpush1.msra.mxu0 0.0
        %834 = vmatprep.subr.mxu0 0.0
        %835 = vmatpush1.msra.mxu0 0.0
        %836 = vmatprep.subr.mxu0 0.0
        %837 = vmatpush1.msra.mxu0 0.0
        %838 = vmatprep.subr.mxu0 0.0
        %839 = vmatpush1.msra.mxu0 0.0
        %840 = vmatprep.subr.mxu0 0.0
        %841 = vmatpush1.msra.mxu0 0.0
        %842 = vmatprep.subr.mxu0 0.0
        %843 = vmatpush1.msra.mxu0 0.0
        %844 = vmatprep.subr.mxu0 0.0
        %845 = vmatpush1.msra.mxu0 0.0
        %846 = vmatprep.subr.mxu0 0.0
        %847 = vmatpush1.msra.mxu0 0.0
        %848 = vmatprep.subr.mxu0 0.0
        %849 = vmatpush1.msra.mxu0 0.0
        %850 = vmatprep.subr.mxu0 0.0
        %851 = vmatpush1.msra.mxu0 0.0
        %852 = vmatprep.subr.mxu0 0.0
        %853 = vmatpush1.msra.mxu0 0.0
        %854 = vmatprep.subr.mxu0 0.0
        %855 = vmatpush1.msra.mxu0 0.0
        %856 = vmatprep.subr.mxu0 0.0
        %857 = vmatpush1.msra.mxu0 0.0
        %858 = vmatprep.subr.mxu0 0.0
        %859 = vmatpush1.msra.mxu0 0.0
        %860 = vmatprep.subr.mxu0 0.0
        %861 = vmatpush1.msra.mxu0 0.0
        %862 = vmatprep.mubr.f32.mxu0 0.0
        %863 = vmatmul.mubr.f32.gmra.mrb[0].mxu0 %v796
        %v864 = vpop.f32.mrb[0].mxu0
        %v865 = vadd.f32 0.0, %v864
        %v866 = vpop.f32.mrb[0].mxu0
        %867 = vdwg.mxu0
        %v869 = vsel %vm677, %v719, 0
        %871 = vmatprep.subr.mxu0 0.0
        %872 = vmatpush1.msra.mxu0 %v342
        %873 = vmatprep.subr.mxu0 0.0
        %874 = vmatpush1.msra.mxu0 %v343
        %875 = vmatprep.subr.mxu0 0.0
        %876 = vmatpush1.msra.mxu0 0.0
        %877 = vmatprep.subr.mxu0 0.0
        %878 = vmatpush1.msra.mxu0 0.0
        %879 = vmatprep.subr.mxu0 0.0
        %880 = vmatpush1.msra.mxu0 0.0
        %881 = vmatprep.subr.mxu0 0.0
        %882 = vmatpush1.msra.mxu0 0.0
        %883 = vmatprep.subr.mxu0 0.0
        %884 = vmatpush1.msra.mxu0 0.0
        %885 = vmatprep.subr.mxu0 0.0
        %886 = vmatpush1.msra.mxu0 0.0
        %887 = vmatprep.subr.mxu0 0.0
        %888 = vmatpush1.msra.mxu0 0.0
        %889 = vmatprep.subr.mxu0 0.0
        %890 = vmatpush1.msra.mxu0 0.0
        %891 = vmatprep.subr.mxu0 0.0
        %892 = vmatpush1.msra.mxu0 0.0
        %893 = vmatprep.subr.mxu0 0.0
        %894 = vmatpush1.msra.mxu0 0.0
        %895 = vmatprep.subr.mxu0 0.0
        %896 = vmatpush1.msra.mxu0 0.0
        %897 = vmatprep.subr.mxu0 0.0
        %898 = vmatpush1.msra.mxu0 0.0
        %899 = vmatprep.subr.mxu0 0.0
        %900 = vmatpush1.msra.mxu0 0.0
        %901 = vmatprep.subr.mxu0 0.0
        %902 = vmatpush1.msra.mxu0 0.0
        %903 = vmatprep.subr.mxu0 0.0
        %904 = vmatpush1.msra.mxu0 0.0
        %905 = vmatprep.subr.mxu0 0.0
        %906 = vmatpush1.msra.mxu0 0.0
        %907 = vmatprep.subr.mxu0 0.0
        %908 = vmatpush1.msra.mxu0 0.0
        %909 = vmatprep.subr.mxu0 0.0
        %910 = vmatpush1.msra.mxu0 0.0
        %911 = vmatprep.subr.mxu0 0.0
        %912 = vmatpush1.msra.mxu0 0.0
        %913 = vmatprep.subr.mxu0 0.0
        %914 = vmatpush1.msra.mxu0 0.0
        %915 = vmatprep.subr.mxu0 0.0
        %916 = vmatpush1.msra.mxu0 0.0
        %917 = vmatprep.subr.mxu0 0.0
        %918 = vmatpush1.msra.mxu0 0.0
        %919 = vmatprep.subr.mxu0 0.0
        %920 = vmatpush1.msra.mxu0 0.0
        %921 = vmatprep.subr.mxu0 0.0
        %922 = vmatpush1.msra.mxu0 0.0
        %923 = vmatprep.subr.mxu0 0.0
        %924 = vmatpush1.msra.mxu0 0.0
        %925 = vmatprep.subr.mxu0 0.0
        %926 = vmatpush1.msra.mxu0 0.0
        %927 = vmatprep.subr.mxu0 0.0
        %928 = vmatpush1.msra.mxu0 0.0
        %929 = vmatprep.subr.mxu0 0.0
        %930 = vmatpush1.msra.mxu0 0.0
        %931 = vmatprep.subr.mxu0 0.0
        %932 = vmatpush1.msra.mxu0 0.0
        %933 = vmatprep.subr.mxu0 0.0
        %934 = vmatpush1.msra.mxu0 0.0
        %935 = vmatprep.mubr.f32.mxu0 0.0
        %936 = vmatmul.mubr.f32.gmra.mrb[0].mxu0 %v869
        %v937 = vpop.f32.mrb[0].mxu0
        %v938 = vadd.f32 0.0, %v937
        %v939 = vpop.f32.mrb[0].mxu0
        %940 = vdwg.mxu0
        %v942 = vsel %vm677, %v721, 0
        %944 = vmatprep.subr.mxu0 0.0
        %945 = vmatpush1.msra.mxu0 %v344
        %946 = vmatprep.subr.mxu0 0.0
        %947 = vmatpush1.msra.mxu0 %v345
        %948 = vmatprep.subr.mxu0 0.0
        %949 = vmatpush1.msra.mxu0 0.0
        %950 = vmatprep.subr.mxu0 0.0
        %951 = vmatpush1.msra.mxu0 0.0
        %952 = vmatprep.subr.mxu0 0.0
        %953 = vmatpush1.msra.mxu0 0.0
        %954 = vmatprep.subr.mxu0 0.0
        %955 = vmatpush1.msra.mxu0 0.0
        %956 = vmatprep.subr.mxu0 0.0
        %957 = vmatpush1.msra.mxu0 0.0
        %958 = vmatprep.subr.mxu0 0.0
        %959 = vmatpush1.msra.mxu0 0.0
        %960 = vmatprep.subr.mxu0 0.0
        %961 = vmatpush1.msra.mxu0 0.0
        %962 = vmatprep.subr.mxu0 0.0
        %963 = vmatpush1.msra.mxu0 0.0
        %964 = vmatprep.subr.mxu0 0.0
        %965 = vmatpush1.msra.mxu0 0.0
        %966 = vmatprep.subr.mxu0 0.0
        %967 = vmatpush1.msra.mxu0 0.0
        %968 = vmatprep.subr.mxu0 0.0
        %969 = vmatpush1.msra.mxu0 0.0
        %970 = vmatprep.subr.mxu0 0.0
        %971 = vmatpush1.msra.mxu0 0.0
        %972 = vmatprep.subr.mxu0 0.0
        %973 = vmatpush1.msra.mxu0 0.0
        %974 = vmatprep.subr.mxu0 0.0
        %975 = vmatpush1.msra.mxu0 0.0
        %976 = vmatprep.subr.mxu0 0.0
        %977 = vmatpush1.msra.mxu0 0.0
        %978 = vmatprep.subr.mxu0 0.0
        %979 = vmatpush1.msra.mxu0 0.0
        %980 = vmatprep.subr.mxu0 0.0
        %981 = vmatpush1.msra.mxu0 0.0
        %982 = vmatprep.subr.mxu0 0.0
        %983 = vmatpush1.msra.mxu0 0.0
        %984 = vmatprep.subr.mxu0 0.0
        %985 = vmatpush1.msra.mxu0 0.0
        %986 = vmatprep.subr.mxu0 0.0
        %987 = vmatpush1.msra.mxu0 0.0
        %988 = vmatprep.subr.mxu0 0.0
        %989 = vmatpush1.msra.mxu0 0.0
        %990 = vmatprep.subr.mxu0 0.0
        %991 = vmatpush1.msra.mxu0 0.0
        %992 = vmatprep.subr.mxu0 0.0
        %993 = vmatpush1.msra.mxu0 0.0
        %994 = vmatprep.subr.mxu0 0.0
        %995 = vmatpush1.msra.mxu0 0.0
        %996 = vmatprep.subr.mxu0 0.0
        %997 = vmatpush1.msra.mxu0 0.0
        %998 = vmatprep.subr.mxu0 0.0
        %999 = vmatpush1.msra.mxu0 0.0
        %1000 = vmatprep.subr.mxu0 0.0
        %1001 = vmatpush1.msra.mxu0 0.0
        %1002 = vmatprep.subr.mxu0 0.0
        %1003 = vmatpush1.msra.mxu0 0.0
        %1004 = vmatprep.subr.mxu0 0.0
        %1005 = vmatpush1.msra.mxu0 0.0
        %1006 = vmatprep.subr.mxu0 0.0
        %1007 = vmatpush1.msra.mxu0 0.0
        %1008 = vmatprep.mubr.f32.mxu0 0.0
        %1009 = vmatmul.mubr.f32.gmra.mrb[0].mxu0 %v942
        %v1010 = vpop.f32.mrb[0].mxu0
        %v1011 = vadd.f32 0.0, %v1010
        %v1012 = vpop.f32.mrb[0].mxu0
        %1013 = vdwg.mxu0
        %v1014 = vcombine.low %v792, %v938
        %v1015 = vcombine.high %v792, %v938
        %v1017 = vunpack.c.l.s4 1983009808
        %v1018 = vunpack.c.0.s8 %v1017
        %v1019 = vlaneseq
        %v1020 = vshrl.u32 %v1019, 7
        %v1021 = vsub.s32 %v1018, %v1020
        %v1022 = vrot.slane %v1014, %v1021
        %v1024 = vunpack.c.l.s4 1983009808
        %v1025 = vunpack.c.0.s8 %v1024
        %v1026 = vlaneseq
        %v1027 = vshrl.u32 %v1026, 7
        %v1028 = vsub.s32 %v1025, %v1027
        %v1029 = vrot.slane %v1015, %v1028
        %v1030 = vcombine.low %v865, %v1011
        %v1031 = vcombine.high %v865, %v1011
        %v1033 = vunpack.c.l.s4 1983009808
        %v1034 = vunpack.c.0.s8 %v1033
        %v1035 = vlaneseq
        %v1036 = vshrl.u32 %v1035, 7
        %v1037 = vsub.s32 %v1034, %v1036
        %v1038 = vrot.slane %v1030, %v1037
        %v1040 = vunpack.c.l.s4 1983009808
        %v1041 = vunpack.c.0.s8 %v1040
        %v1042 = vlaneseq
        %v1043 = vshrl.u32 %v1042, 7
        %v1044 = vsub.s32 %v1041, %v1043
        %v1045 = vrot.slane %v1031, %v1044
        %v1046 = vcombine.low %v1022, %v1038
        %v1047 = vcombine.high %v1022, %v1038
        %v1049 = vunpack.c.l.s4 1934713408
        %v1050 = vunpack.c.0.s8 %v1049
        %v1051 = vlaneseq
        %v1052 = vshrl.u32 %v1051, 7
        %v1053 = vsub.s32 %v1050, %v1052
        %v1054 = vrot.slane %v1046, %v1053
        %v1056 = vunpack.c.l.s4 1934713408
        %v1057 = vunpack.c.0.s8 %v1056
        %v1058 = vlaneseq
        %v1059 = vshrl.u32 %v1058, 7
        %v1060 = vsub.s32 %v1057, %v1059
        %v1061 = vrot.slane %v1047, %v1060
        %v1062 = vcombine.low %v1029, %v1045
        %v1063 = vcombine.high %v1029, %v1045
        %v1065 = vunpack.c.l.s4 1934713408
        %v1066 = vunpack.c.0.s8 %v1065
        %v1067 = vlaneseq
        %v1068 = vshrl.u32 %v1067, 7
        %v1069 = vsub.s32 %v1066, %v1068
        %v1070 = vrot.slane %v1062, %v1069
        %v1072 = vunpack.c.l.s4 1934713408
        %v1073 = vunpack.c.0.s8 %v1072
        %v1074 = vlaneseq
        %v1075 = vshrl.u32 %v1074, 7
        %v1076 = vsub.s32 %v1073, %v1075
        %v1077 = vrot.slane %v1063, %v1076
        %v1078 = vcombine.high %v1054, 0.0
        %v1079 = vcombine.high %v1061, 0.0
        %v1080 = vcombine.high %v1070, 0.0
        %v1081 = vcombine.high %v1077, 0.0
        %v1082 = vcombine.low %v1054, %v1061
        %v1084 = vunpack.c.l.s4 1983009808
        %v1085 = vunpack.c.0.s8 %v1084
        %v1086 = vlaneseq
        %v1087 = vshrl.u32 %v1086, 7
        %v1088 = vsub.s32 %v1085, %v1087
        %v1089 = vrot.slane %v1082, %v1088
        %v1090 = vcombine.low %v1078, %v1079
        %v1092 = vunpack.c.l.s4 1983009808
        %v1093 = vunpack.c.0.s8 %v1092
        %v1094 = vlaneseq
        %v1095 = vshrl.u32 %v1094, 7
        %v1096 = vsub.s32 %v1093, %v1095
        %v1097 = vrot.slane %v1090, %v1096
        %v1098 = vcombine.low %v1070, %v1077
        %v1100 = vunpack.c.l.s4 1983009808
        %v1101 = vunpack.c.0.s8 %v1100
        %v1102 = vlaneseq
        %v1103 = vshrl.u32 %v1102, 7
        %v1104 = vsub.s32 %v1101, %v1103
        %v1105 = vrot.slane %v1098, %v1104
        %v1106 = vcombine.low %v1080, %v1081
        %v1108 = vunpack.c.l.s4 1983009808
        %v1109 = vunpack.c.0.s8 %v1108
        %v1110 = vlaneseq
        %v1111 = vshrl.u32 %v1110, 7
        %v1112 = vsub.s32 %v1109, %v1111
        %v1113 = vrot.slane %v1106, %v1112
        %v1114 = vcombine.low %v1089, %v1097
        %v1115 = vcombine.high %v1089, %v1097
        %v1117 = vunpack.c.l.s4 1934713408
        %v1118 = vunpack.c.0.s8 %v1117
        %v1119 = vlaneseq
        %v1120 = vshrl.u32 %v1119, 7
        %v1121 = vsub.s32 %v1118, %v1120
        %v1122 = vrot.slane %v1114, %v1121
        %v1124 = vunpack.c.l.s4 1934713408
        %v1125 = vunpack.c.0.s8 %v1124
        %v1126 = vlaneseq
        %v1127 = vshrl.u32 %v1126, 7
        %v1128 = vsub.s32 %v1125, %v1127
        %v1129 = vrot.slane %v1115, %v1128
        %v1130 = vcombine.low %v1105, %v1113
        %v1131 = vcombine.high %v1105, %v1113
        %v1133 = vunpack.c.l.s4 1934713408
        %v1134 = vunpack.c.0.s8 %v1133
        %v1135 = vlaneseq
        %v1136 = vshrl.u32 %v1135, 7
        %v1137 = vsub.s32 %v1134, %v1136
        %v1138 = vrot.slane %v1130, %v1137
        %v1140 = vunpack.c.l.s4 1934713408
        %v1141 = vunpack.c.0.s8 %v1140
        %v1142 = vlaneseq
        %v1143 = vshrl.u32 %v1142, 7
        %v1144 = vsub.s32 %v1141, %v1143
        %v1145 = vrot.slane %v1131, %v1144
        %v1146 = vcombine.low %v1122, %v1138
        %v1147 = vcombine.high %v1122, %v1138
        %v1148 = vcombine.low %v1129, %v1145
        %v1149 = vcombine.high %v1129, %v1145
        %1151 = vrot.lane.b32.xlu0 %v1147, 8
        %v1152 = vpop.permute.xlu0 %1151
        %1155 = vrot.lane.b32.xlu0 %v1148, 16
        %v1156 = vpop.permute.xlu0 %1155
        %1159 = vrot.lane.b32.xlu0 %v1149, 24
        %v1160 = vpop.permute.xlu0 %1159
        %v1162 = vsel %vm346, %v1146, %v1152
        %v1163 = vsel %vm677, %v1162, %v1156
        %vm1164 = vcmask 195584
        %v1165 = vsel %vm1164, %v1163, %v1160
        %vm1166 = vcmask 261120
        %1167 = vst.msk [vmem:[%s302] sm:$0xff] %vm1166, %v1165
        %s1168 = sand.u32 %s134, 1
        %s1169 = scalar_lea.sflag [#allocation4], %s1168
        %s1170 = sand.u32 %s134, 1
        %s1171 = smul.addr %s1170, 8
        %s1172 = scalar_lea.vmem [#allocation3], %s1171
        // Predicated region
        $region71: #{tpu_custom_call.1} parent=65 // pred_check
          %p1173 = pneg %p144
        $region72: #{tpu_custom_call.1} parent=65 // pred_check_branch
          %1175 = sbr.rel (%p1173) target = $region74
        $region73: #{tpu_custom_call.1} parent=65 // pred_region
          %s1177 = ssub.s32 128, 128
          %1178 = vsyncadd %s1169, %s1177
          %s1179 = sadd.s32 %s23, %s24
          %s1180 = smul.addr %s22, 2
          %s1181 = sadd.s32 %s1179, %s1180
          %s1182 = smul.addr %s1181, 128
          %s1183 = scalar_lea.hbm %s3, %s1182
          %s1185 = sshll.u32 %s1172, 4
          %s1186 = int_to_ptr.vmem [resolvable:$true] %s1185
          %1188 = dma.vmem_to_hbm [thread:$0]  %s1186, 128, %s1183, %s1169
        $region74: #{tpu_custom_call.1} parent=65 // pred_fallthru
          _
      $region66: #{tpu_custom_call.1} parent=5 // pred_fallthru
        _
      %p1189 = scmp.le.s32.totalorder 2, %s12
      // Predicated region
      $region75: #{tpu_custom_call.1} parent=5 // pred_check
        %p1190 = pneg %p1189
      $region76: #{tpu_custom_call.1} parent=5 // pred_check_branch
        %1192 = sbr.rel (%p1190) target = $region78
      $region77: #{tpu_custom_call.1} parent=5 // pred_region
        %s1193 = ssub.s32 %s12, 2
        // Predicated region
        $region79: #{tpu_custom_call.1} parent=77 // pred_check
          %p1194 = pneg %p150
        $region80: #{tpu_custom_call.1} parent=77 // pred_check_branch
          %1196 = sbr.rel (%p1194) target = $region82
        $region81: #{tpu_custom_call.1} parent=77 // pred_region
          %s1197 = sand.u32 %s135, 1
          %s1198 = scalar_lea.sflag [#allocation4], %s1197
          %s1199 = sand.u32 %s135, 1
          %s1200 = smul.addr %s1199, 8
          %s1201 = scalar_lea.vmem [#allocation3], %s1200
          %1202 = dma.done %s1198, 128
        $region82: #{tpu_custom_call.1} parent=77 // pred_fallthru
          _
      $region78: #{tpu_custom_call.1} parent=5 // pred_fallthru
        _
    $region6: #{tpu_custom_call.1} parent=1 // loop_footer
      %s16 = sadd.s32 1, %s12
    $region7: #{tpu_custom_call.1} parent=1 // loop_footer_branch
      %11 = sbr.rel target = $region3
    $region8: #{tpu_custom_call.1} parent=1 // loop_exit
      _
    %1203 = vsyncpa [#allocation4], 1
    %s1204 = scalar_lea.sflag [#allocation4], 1
    %1205 = vsyncpa %s1204, 1

</llo_original>
